<compile_context>
chip_gen: v6e
topology: v6e:2x2x1
jax: 0.10.0
libtpu: 0.0.40
codegen_flags: <defaults>
</compile_context>

<pallas_src>
import math
import numpy as np
import jax
import jax.numpy as jnp
from jax.experimental import pallas as pl
from jax.experimental.pallas import tpu as pltpu


_NEG_SLOPE = 0.2
_ACT_GAIN = math.sqrt(2.0)


def _round_up(x, m):
    return (x + m - 1) // m * m


def _pick_tile(dim, tile_default):
    """Return (tile, padded_dim). Small dims get a single full-extent block
    (no padding, no (8,128) alignment requirement); larger dims are tiled with
    the aligned default tile and padded up to a multiple of it."""
    if dim <= tile_default:
        return dim, dim
    return tile_default, _round_up(dim, tile_default)


# ---------------------------------------------------------------------------
# Kernel bodies (activation flag baked in at trace time)
# ---------------------------------------------------------------------------

def _kernel_single_k(activation):
    """K fits in one block: no reduction grid axis, no accumulator scratch."""

    def kernel(x_ref, w_ref, b_ref, o_ref):
        out = jnp.dot(x_ref[...], w_ref[...], preferred_element_type=jnp.float32)
        out = out + b_ref[...]                      # bias already * lr_mul
        if activation:
            out = jnp.where(out >= 0, out, _NEG_SLOPE * out) * _ACT_GAIN
        o_ref[...] = out.astype(o_ref.dtype)

    return kernel


def _kernel_multi_k(activation):
    """General path: 3-D grid, K (reduction) innermost, f32 VMEM accumulator."""

    def kernel(x_ref, w_ref, b_ref, o_ref, acc_ref):
        k = pl.program_id(2)

        @pl.when(k == 0)
        def _init():
            acc_ref[...] = jnp.zeros_like(acc_ref)

        acc_ref[...] += jnp.dot(x_ref[...], w_ref[...],
                                preferred_element_type=jnp.float32)

        @pl.when(k == pl.num_programs(2) - 1)
        def _finalize():
            out = acc_ref[...] + b_ref[...]
            if activation:
                out = jnp.where(out >= 0, out, _NEG_SLOPE * out) * _ACT_GAIN
            o_ref[...] = out.astype(o_ref.dtype)

    return kernel


# ---------------------------------------------------------------------------
# One-time parameter preparation (fold scale / lr_mul, transpose, pad)
# ---------------------------------------------------------------------------

def prepare_equal_linear_params(weight, bias, scale, lr_mul,
                                tn_default=512, tk_default=1024):
    """weight: [out_dim, in_dim], bias: [out_dim] or None."""
    N, K = weight.shape
    tk, Kp = _pick_tile(K, tk_default)
    tn, Np = _pick_tile(N, tn_default)

    w_t = (weight * scale).T                       # (K, N) with scale folded in
    if Kp > K or Np > N:
        w_t = jnp.pad(w_t, ((0, Kp - K), (0, Np - N)))

    if bias is None:
        b = jnp.zeros((N,), jnp.float32)
    else:
        b = bias.astype(jnp.float32) * lr_mul      # lr_mul folded in
    if Np > N:
        b = jnp.pad(b, (0, Np - N))
    b = b.reshape(1, Np)

    return dict(w_t=w_t, b=b, N=N, K=K, tn=tn, tk=tk, Np=Np, Kp=Kp)


# ---------------------------------------------------------------------------
# Forward
# ---------------------------------------------------------------------------

def equal_linear_apply(x, params, activation=None, tm_default=512):
    w_t, b = params["w_t"], params["b"]
    N, K = params["N"], params["K"]
    tn, tk, Np, Kp = params["tn"], params["tk"], params["Np"], params["Kp"]

    orig_shape = x.shape
    assert orig_shape[-1] == K, (orig_shape, K)
    M = int(np.prod(orig_shape[:-1])) if len(orig_shape) > 1 else 1
    out_dtype = x.dtype

    x2 = x.reshape(M, K)
    tm, Mp = _pick_tile(M, tm_default)
    if Mp > M or Kp > K:                           # pad only if actually tiled
        x2 = jnp.pad(x2, ((0, Mp - M), (0, Kp - K)))

    grid_m, grid_n, grid_k = Mp // tm, Np // tn, Kp // tk

    xb = jnp.dtype(x2.dtype).itemsize
    wb = jnp.dtype(w_t.dtype).itemsize
    ob = jnp.dtype(out_dtype).itemsize

    # Double-buffered VMEM footprint -> explicit scoped-VMEM limit
    # (fits v7x's 64 MiB per-TC VMEM; also raises v5e's 16 MiB default).
    footprint = 2 * (tm * tk * xb + tk * tn * wb + tn * 4 + tm * tn * ob)
    if grid_k > 1:
        footprint += tm * tn * 4                   # f32 accumulator scratch
    vmem_limit = int(min(max(2 * footprint, 32 << 20), 60 << 20))

    cost = pl.CostEstimate(
        flops=2 * M * N * K,
        transcendentals=0,
        bytes_accessed=M * K * xb + K * N * wb + N * 4 + M * N * ob,
    )

    if grid_k == 1:
        # Resident-weight / no-reduction path: whole K in one block, result
        # written directly to o_ref (no scratch, no init/finalize).
        out = pl.pallas_call(
            _kernel_single_k(activation),
            out_shape=jax.ShapeDtypeStruct((Mp, Np), out_dtype),
            grid_spec=pltpu.PrefetchScalarGridSpec(
                num_scalar_prefetch=0,
                grid=(grid_m, grid_n),
                in_specs=[
                    pl.BlockSpec((tm, Kp), lambda i, j: (i, 0)),   # activations
                    pl.BlockSpec((Kp, tn), lambda i, j: (0, j)),   # weight.T (pre-scaled)
                    pl.BlockSpec((1, tn), lambda i, j: (0, j)),    # bias row (pre-scaled)
                ],
                out_specs=pl.BlockSpec((tm, tn), lambda i, j: (i, j)),
            ),
            compiler_params=pltpu.CompilerParams(
                dimension_semantics=("parallel", "parallel"),
                vmem_limit_bytes=vmem_limit),
            cost_estimate=cost,
        )(x2, w_t, b)
    else:
        out = pl.pallas_call(
            _kernel_multi_k(activation),
            out_shape=jax.ShapeDtypeStruct((Mp, Np), out_dtype),
            grid_spec=pltpu.PrefetchScalarGridSpec(
                num_scalar_prefetch=0,
                grid=(grid_m, grid_n, grid_k),
                in_specs=[
                    pl.BlockSpec((tm, tk), lambda i, j, k: (i, k)),
                    pl.BlockSpec((tk, tn), lambda i, j, k: (k, j)),
                    pl.BlockSpec((1, tn), lambda i, j, k: (0, j)),
                ],
                out_specs=pl.BlockSpec((tm, tn), lambda i, j, k: (i, j)),
                scratch_shapes=[pltpu.VMEM((tm, tn), jnp.float32)],
            ),
            compiler_params=pltpu.CompilerParams(
                dimension_semantics=("parallel", "parallel", "arbitrary"),
                vmem_limit_bytes=vmem_limit),
            cost_estimate=cost,
        )(x2, w_t, b)

    if Mp > M or Np > N:
        out = out[:M, :N]
    return out.reshape(*orig_shape[:-1], N)


def equal_linear(x, weight, bias, scale, lr_mul, activation=None):
    """One-off convenience wrapper (preps params every call; prefer the class)."""
    params = prepare_equal_linear_params(weight, bias, scale, lr_mul)
    return equal_linear_apply(x, params, activation)


class EqualLinear:
    """JAX/Pallas equivalent of the PyTorch EqualLinear module (forward only)."""

    def __init__(self, in_dim, out_dim, bias=True, bias_init=0.0, lr_mul=1.0,
                 activation=None, *, key):
        self.weight = jax.random.normal(key, (out_dim, in_dim), jnp.float32) / lr_mul
        self.bias = (jnp.full((out_dim,), float(bias_init), jnp.float32)
                     if bias else None)
        self.activation = activation
        self.scale = (1.0 / math.sqrt(in_dim)) * lr_mul
        self.lr_mul = lr_mul
        # Fold scale / lr_mul, transpose & pad once here, not per forward call.
        self._params = prepare_equal_linear_params(self.weight, self.bias,
                                                   self.scale, self.lr_mul)

    def __call__(self, x):
        return equal_linear_apply(x, self._params, self.activation)


# ---------------------------------------------------------------------------
# Reference + tests
# ---------------------------------------------------------------------------

def _ref_equal_linear(x, weight, bias, scale, lr_mul, activation):
    x = np.asarray(x, np.float64)
    w = np.asarray(weight, np.float64)
    out = x @ (w * scale).T
    b = np.zeros(w.shape[0]) if bias is None else np.asarray(bias, np.float64)
    out = out + b * lr_mul
    if activation:
        out = np.where(out >= 0, out, 0.2 * out) * math.sqrt(2.0)
    return out


if __name__ == "__main__":
    key = jax.random.PRNGKey(0)
    k_x, k_w1, k_w2, k_x3, k_w3 = jax.random.split(key, 5)

    batch, seq, in_dim, out_dim = 2, 8, 32, 32
    x = jax.random.normal(k_x, (batch, seq, in_dim), jnp.float32)

    # Default MXU precision (single bf16 pass, f32 accumulate) => relaxed tol.
    TOL = dict(rtol=3e-2, atol=3e-2)

    # 1) plain linear + bias (activation=None), resident-weight single-K path
    lin = EqualLinear(in_dim, out_dim, bias=True, bias_init=0.1, lr_mul=0.5,
                      activation=None, key=k_w1)
    y = jax.block_until_ready(lin(x))
    y_ref = _ref_equal_linear(np.asarray(x), np.asarray(lin.weight),
                              np.asarray(lin.bias), lin.scale, lin.lr_mul, None)
    assert y.shape == (batch, seq, out_dim), y.shape
    np.testing.assert_allclose(np.asarray(y), y_ref, **TOL)

    # 2) fused leaky-relu path
    lin_act = EqualLinear(in_dim, out_dim, bias=True, bias_init=0.0, lr_mul=1.0,
                          activation="fused_lrelu", key=k_w2)
    y2 = jax.block_until_ready(lin_act(x))
    y2_ref = _ref_equal_linear(np.asarray(x), np.asarray(lin_act.weight),
                               np.asarray(lin_act.bias), lin_act.scale,
                               lin_act.lr_mul, "fused_lrelu")
    assert y2.shape == (batch, seq, out_dim), y2.shape
    np.testing.assert_allclose(np.asarray(y2), y2_ref, **TOL)

    # 3) exercise the K-reduction (multi-K) path with a small forced tk
    in3, out3 = 256, 32
    x3 = jax.random.normal(k_x3, (batch, seq, in3), jnp.float32)
    lr3 = 1.0
    w3 = jax.random.normal(k_w3, (out3, in3), jnp.float32) / lr3
    b3 = jnp.full((out3,), 0.05, jnp.float32)
    scale3 = (1.0 / math.sqrt(in3)) * lr3
    params3 = prepare_equal_linear_params(w3, b3, scale3, lr3, tk_default=128)
    y3 = jax.block_until_ready(
        equal_linear_apply(x3, params3, activation="fused_lrelu"))
    y3_ref = _ref_equal_linear(np.asarray(x3), np.asarray(w3), np.asarray(b3),
                               scale3, lr3, "fused_lrelu")
    assert y3.shape == (batch, seq, out3), y3.shape
    np.testing.assert_allclose(np.asarray(y3), y3_ref, **TOL)

    print("KERNEL_OK")
</pallas_src>

<mosaic_0001>
module attributes {stable_mosaic.version = 11 : i64} {
  func.func @kernel(%arg0: i32, %arg1: i32, %arg2: memref<16x32xf32, #tpu.memory_space<vmem>>, %arg3: memref<32x32xf32, #tpu.memory_space<vmem>>, %arg4: memref<1x32xf32, #tpu.memory_space<vmem>>, %arg5: memref<16x32xf32, #tpu.memory_space<vmem>>) attributes {dimension_semantics = [#tpu.dimension_semantics<parallel>, #tpu.dimension_semantics<parallel>], iteration_bounds = array<i64: 1, 1>, scalar_prefetch = 0 : i64, scratch_operands = 0 : i64, tpu.core_type = #tpu.core_type<tc>, window_params = [{transform_indices = @transform_0, window_bounds = array<i64: 16, 32>}, {transform_indices = @transform_1, window_bounds = array<i64: 32, 32>}, {transform_indices = @transform_2, window_bounds = array<i64: 1, 32>}, {transform_indices = @transform_3, window_bounds = array<i64: 16, 32>}]} {
    %c0 = arith.constant 0 : index
    %c0_0 = arith.constant 0 : index
    %0 = vector.load %arg2[%c0, %c0_0] : memref<16x32xf32, #tpu.memory_space<vmem>>, vector<16x32xf32>
    %c0_1 = arith.constant 0 : index
    %c0_2 = arith.constant 0 : index
    %1 = vector.load %arg3[%c0_1, %c0_2] : memref<32x32xf32, #tpu.memory_space<vmem>>, vector<32x32xf32>
    %cst = arith.constant dense<0.000000e+00> : vector<16x32xf32>
    %2 = tpu.matmul %0, %1, %cst {dimension_numbers = #tpu.dot_dimension_numbers<[1], [0], [0], [1], [0, 0, 1, 1], [], []>} : vector<16x32xf32>, vector<32x32xf32>, vector<16x32xf32> -> vector<16x32xf32>
    %c0_3 = arith.constant 0 : index
    %c0_4 = arith.constant 0 : index
    %3 = vector.load %arg4[%c0_3, %c0_4] : memref<1x32xf32, #tpu.memory_space<vmem>>, vector<1x32xf32>
    %4 = vector.broadcast %3 : vector<1x32xf32> to vector<16x32xf32>
    %5 = arith.addf %2, %4 : vector<16x32xf32>
    %c0_5 = arith.constant 0 : index
    %c0_6 = arith.constant 0 : index
    %6 = vector.load %arg5[%c0_5, %c0_6] : memref<16x32xf32, #tpu.memory_space<vmem>>, vector<16x32xf32>
    tpu.vector_store %arg5[%c0_5, %c0_6], %5 {strides = array<i32>} : memref<16x32xf32, #tpu.memory_space<vmem>>, vector<16x32xf32>,
    return
  }
  func.func @transform_0(%arg0: i32, %arg1: i32) -> (i32, i32) {
    %c0_i32 = arith.constant 0 : i32
    %c0_i32_0 = arith.constant 0 : i32
    return %arg0, %c0_i32 : i32, i32
  }
  func.func @transform_1(%arg0: i32, %arg1: i32) -> (i32, i32) {
    %c0_i32 = arith.constant 0 : i32
    %c0_i32_0 = arith.constant 0 : i32
    return %c0_i32, %arg1 : i32, i32
  }
  func.func @transform_2(%arg0: i32, %arg1: i32) -> (i32, i32) {
    %c0_i32 = arith.constant 0 : i32
    %c0_i32_0 = arith.constant 0 : i32
    return %c0_i32, %arg1 : i32, i32
  }
  func.func @transform_3(%arg0: i32, %arg1: i32) -> (i32, i32) {
    %c0_i32 = arith.constant 0 : i32
    return %arg0, %arg1 : i32, i32
  }
}

</mosaic_0001>

<llo_original>
// kernel: tpu_custom_call.1
$region0: #{tpu_custom_call.1}
  #allocation0 [shape = 'u32[]', space=smem, size = 0x4, offset = 0x4, fixed_abs, tag = 'smem constant byte address 0x4 - core index']
  #allocation1 [shape = 'u32[144,128]{1,0:T(1,128)}', space=vmem, size = 0x12000, scoped, tag = 'internal scratch']
  %s0 = inlined_call_operand.hbm [shape: f32[16,32], index: 0, kind: input, shape index: {}]
  %s1 = inlined_call_operand.hbm [shape: f32[32,32], index: 1, kind: input, shape index: {}]
  %s2 = inlined_call_operand.vmem [shape: f32[1,32], index: 2, kind: input, shape index: {}]
  %s3 = inlined_call_operand.hbm [shape: f32[16,32], index: 3, kind: output, shape index: {}]
  %s4 = sld [smem:[#allocation0]]
  $region30: #{tpu_custom_call.1} parent=0
    _
  %s6 = ssub.s32 1, %s4
  %s7 = scalar_select 0, %s6, %s4
  $region1: #{tpu_custom_call.1} parent=0
    #allocation2 [shape = 'u8[8192]{0}', space=vmem, size = 0x2000, scoped, tag = 'input window, operand 0, single buffered']
    #allocation3 [shape = 's32[1]{0}', space=sflag, size = 0x4, scoped, tag = 'scoped memory for tpu_custom_call.1']
    #allocation4 [shape = 's32[1]{0}', space=sflag, size = 0x4, scoped, tag = 'scoped memory for tpu_custom_call.1']
    #allocation5 [shape = 'u8[16384]{0}', space=vmem, size = 0x4000, scoped, tag = 'input window, operand 1, single buffered']
    #allocation6 [shape = 's32[1]{0}', space=sflag, size = 0x4, scoped, tag = 'scoped memory for tpu_custom_call.1']
    #allocation7 [shape = 'u8[8192]{0}', space=vmem, size = 0x2000, scoped, tag = 'output window, operand 0, single buffered']
    %8 = vsyncpa [#allocation3], 0
    %9 = vsyncpa [#allocation6], 0
    %10 = vsyncpa [#allocation4], 0
    // Predicated region
    $region2: #{tpu_custom_call.1} parent=1 // pred_check
      _
    $region3: #{tpu_custom_call.1} parent=1 // pred_check_branch
      %12 = sbr.rel (0) target = $region5
    $region4: #{tpu_custom_call.1} parent=1 // pred_region
      %s14 = ssub.s32 256, 256
      %15 = vsyncadd [#allocation3], %s14
      %s16 = sshll.u32 [#allocation2], 4
      %s17 = int_to_ptr.vmem [resolvable:$true] %s16
      %22 = dma.hbm_to_vmem [thread:$0]  %s0, 256, %s17, [#allocation3], 128, 128, 8
    $region5: #{tpu_custom_call.1} parent=1 // pred_fallthru
      _
    // Predicated region
    $region6: #{tpu_custom_call.1} parent=1 // pred_check
      _
    $region7: #{tpu_custom_call.1} parent=1 // pred_check_branch
      %24 = sbr.rel (0) target = $region9
    $region8: #{tpu_custom_call.1} parent=1 // pred_region
      %s26 = ssub.s32 512, 512
      %27 = vsyncadd [#allocation6], %s26
      %s28 = sshll.u32 [#allocation5], 4
      %s29 = int_to_ptr.vmem [resolvable:$true] %s28
      %34 = dma.hbm_to_vmem [thread:$0]  %s1, 512, %s29, [#allocation6], 128, 128, 8
    $region9: #{tpu_custom_call.1} parent=1 // pred_fallthru
      _
    // Predicated region
    $region10: #{tpu_custom_call.1} parent=1 // pred_check
      _
    $region11: #{tpu_custom_call.1} parent=1 // pred_check_branch
      %36 = sbr.rel (0) target = $region13
    $region12: #{tpu_custom_call.1} parent=1 // pred_region
      _
    $region13: #{tpu_custom_call.1} parent=1 // pred_fallthru
      _
    // Predicated region
    $region14: #{tpu_custom_call.1} parent=1 // pred_check
      _
    $region15: #{tpu_custom_call.1} parent=1 // pred_check_branch
      %38 = sbr.rel (0) target = $region17
    $region16: #{tpu_custom_call.1} parent=1 // pred_region
      %39 = dma.done [#allocation3], 256
    $region17: #{tpu_custom_call.1} parent=1 // pred_fallthru
      _
    // Predicated region
    $region18: #{tpu_custom_call.1} parent=1 // pred_check
      _
    $region19: #{tpu_custom_call.1} parent=1 // pred_check_branch
      %41 = sbr.rel (0) target = $region21
    $region20: #{tpu_custom_call.1} parent=1 // pred_region
      %42 = dma.done [#allocation6], 512
    $region21: #{tpu_custom_call.1} parent=1 // pred_fallthru
      _
    %v43 = vld [vmem:[#allocation2] sm:$0xff]
    %v44 = vld [vmem:[#allocation2 + $0x8] sm:$0xff]
    %v45 = vld [vmem:[#allocation5] sm:$0xff]
    %v46 = vld [vmem:[#allocation5 + $0x8] sm:$0xff]
    %v47 = vld [vmem:[#allocation5 + $0x10] sm:$0xff]
    %v48 = vld [vmem:[#allocation5 + $0x18] sm:$0xff]
    %v49 = vld [vmem:[%s2] sm:$0x1]
    %v51 = vlaneseq
    %v52 = vshrl.u32 %v51, 7
    %v53 = vsub.s32 0, %v52
    %v54 = vrot.slane %v49, %v53
    %vm56 = vcmask 261120
    %v58 = vsel %vm56, %v43, 0
    %v61 = vsel %vm56, %v44, 0
    %63 = vmatprep.subr.mxu0 0.0
    %64 = vmatpush1.msra.mxu0 0.0
    %65 = vmatprep.subr.mxu0 0.0
    %66 = vmatpush1.msra.mxu0 0.0
    %67 = vmatprep.subr.mxu0 0.0
    %68 = vmatpush1.msra.mxu0 0.0
    %69 = vmatprep.subr.mxu0 0.0
    %70 = vmatpush1.msra.mxu0 0.0
    %71 = vmatprep.subr.mxu0 0.0
    %72 = vmatpush1.msra.mxu0 0.0
    %73 = vmatprep.subr.mxu0 0.0
    %74 = vmatpush1.msra.mxu0 0.0
    %75 = vmatprep.subr.mxu0 0.0
    %76 = vmatpush1.msra.mxu0 0.0
    %77 = vmatprep.subr.mxu0 0.0
    %78 = vmatpush1.msra.mxu0 0.0
    %79 = vmatprep.subr.mxu0 0.0
    %80 = vmatpush1.msra.mxu0 0.0
    %81 = vmatprep.subr.mxu0 0.0
    %82 = vmatpush1.msra.mxu0 0.0
    %83 = vmatprep.subr.mxu0 0.0
    %84 = vmatpush1.msra.mxu0 0.0
    %85 = vmatprep.subr.mxu0 0.0
    %86 = vmatpush1.msra.mxu0 0.0
    %87 = vmatprep.subr.mxu0 0.0
    %88 = vmatpush1.msra.mxu0 %v48
    %89 = vmatprep.subr.mxu0 0.0
    %90 = vmatpush1.msra.mxu0 %v47
    %91 = vmatprep.subr.mxu0 0.0
    %92 = vmatpush1.msra.mxu0 %v46
    %93 = vmatprep.subr.mxu0 0.0
    %94 = vmatpush1.msra.mxu0 %v45
    %95 = vmatprep.subr.mxu0 0.0
    %96 = vmatpush2.msra.mxu0 0.0
    %97 = vmatprep.subr.mxu0 0.0
    %98 = vmatpush2.msra.mxu0 0.0
    %99 = vmatprep.subr.mxu0 0.0
    %100 = vmatpush2.msra.mxu0 0.0
    %101 = vmatprep.subr.mxu0 0.0
    %102 = vmatpush2.msra.mxu0 0.0
    %103 = vmatprep.subr.mxu0 0.0
    %104 = vmatpush2.msra.mxu0 0.0
    %105 = vmatprep.subr.mxu0 0.0
    %106 = vmatpush2.msra.mxu0 0.0
    %107 = vmatprep.subr.mxu0 0.0
    %108 = vmatpush2.msra.mxu0 0.0
    %109 = vmatprep.subr.mxu0 0.0
    %110 = vmatpush2.msra.mxu0 0.0
    %111 = vmatprep.subr.mxu0 0.0
    %112 = vmatpush2.msra.mxu0 0.0
    %113 = vmatprep.subr.mxu0 0.0
    %114 = vmatpush2.msra.mxu0 0.0
    %115 = vmatprep.subr.mxu0 0.0
    %116 = vmatpush2.msra.mxu0 0.0
    %117 = vmatprep.subr.mxu0 0.0
    %118 = vmatpush2.msra.mxu0 0.0
    %119 = vmatprep.subr.mxu0 0.0
    %120 = vmatpush2.msra.mxu0 0.0
    %121 = vmatprep.subr.mxu0 0.0
    %122 = vmatpush2.msra.mxu0 0.0
    %123 = vmatprep.subr.mxu0 0.0
    %124 = vmatpush2.msra.mxu0 0.0
    %125 = vmatprep.subr.mxu0 0.0
    %126 = vmatpush2.msra.mxu0 0.0
    %127 = vmatprep.mubr.f32.mxu0 0.0
    %128 = vmatmul.mubr.f32.gmra.mxu0 %v58
    %v129 = vpop.f32.mrf.mxu0
    %v130 = vadd.f32 %v54, %v129
    %v131 = vpop.f32.mrf.mxu0
    %132 = vmatprep.mubr.f32.mxu0 0.0
    %133 = vmatmul.mubr.f32.gmra.mxu0 %v61
    %v134 = vpop.f32.mrf.mxu0
    %v135 = vadd.f32 %v54, %v134
    %v136 = vpop.f32.mrf.mxu0
    %137 = vdwg.mxu0
    %138 = vst.msk [vmem:[#allocation7] sm:$0xff] %vm56, %v130
    %139 = vst.msk [vmem:[#allocation7 + $0x8] sm:$0xff] %vm56, %v135
    // Predicated region
    $region22: #{tpu_custom_call.1} parent=1 // pred_check
      _
    $region23: #{tpu_custom_call.1} parent=1 // pred_check_branch
      %141 = sbr.rel (0) target = $region25
    $region24: #{tpu_custom_call.1} parent=1 // pred_region
      %s143 = ssub.s32 256, 256
      %144 = vsyncadd [#allocation4], %s143
      %s145 = sshll.u32 [#allocation7], 4
      %s146 = int_to_ptr.vmem [resolvable:$true] %s145
      %151 = dma.vmem_to_hbm [thread:$0]  %s146, 256, %s3, [#allocation4], 128, 128, 8
    $region25: #{tpu_custom_call.1} parent=1 // pred_fallthru
      _
    // Predicated region
    $region26: #{tpu_custom_call.1} parent=1 // pred_check
      _
    $region27: #{tpu_custom_call.1} parent=1 // pred_check_branch
      %153 = sbr.rel (0) target = $region29
    $region28: #{tpu_custom_call.1} parent=1 // pred_region
      %154 = dma.done [#allocation4], 256
    $region29: #{tpu_custom_call.1} parent=1 // pred_fallthru
      _
    %155 = vsyncpa [#allocation3], 1
    %156 = vsyncpa [#allocation6], 1
    %157 = vsyncpa [#allocation4], 1

</llo_original>
